<compile_context>
chip_gen: v7x
topology: tpu7x:2x2x1
jax: 0.10.0
libtpu: 0.0.40
codegen_flags: <defaults>
</compile_context>

<pallas_src>
import functools

import jax
import jax.numpy as jnp
from jax import lax
from jax.experimental import pallas as pl
from jax.experimental.pallas import tpu as pltpu


def _round_up(v, m):
    return (v + m - 1) // m * m


def _biaffine_kernel(x_ref, y_ref, w_ref, o_ref, tmp_ref, *, o_tile, k2):
    # x_ref  : (1, Lxb, K1)        y_ref : (1, Lyp, K2)
    # w_ref  : (K1, o_tile*K2)     o_ref : (1, o_tile, Lxb, Lyp)
    # tmp_ref: (Lxb, o_tile*K2)    VMEM scratch in the input dtype
    #
    # Stage 1: one wide MXU matmul covering all o_tile channels. bias_x is already folded
    # in by the wrapper (ones column in x / bias row inside W's padded layout).
    tmp_ref[...] = jnp.dot(
        x_ref[0], w_ref[...], preferred_element_type=jnp.float32
    ).astype(tmp_ref.dtype)

    y = y_ref[0]                                     # [Lyp, K2], kept in input dtype
    dn = (((1,), (1,)), ((), ()))                    # A @ B^T: contract last dim of both

    def channel(t, chunk):
        # bias_y column + corner term ride along automatically: the wrapper put the
        # original bias_y weight column inside K2's padded region and a matching ones
        # column in y, so this single matmul is the full per-channel score.
        s = lax.dot_general(chunk, y, dimension_numbers=dn,
                            preferred_element_type=jnp.float32)
        o_ref[0, t] = s.astype(o_ref.dtype)

    if o_tile <= 4:
        for t in range(o_tile):                      # short static unroll, static slices
            channel(t, tmp_ref[:, t * k2:(t + 1) * k2])
    else:
        @pl.loop(0, o_tile)
        def _(t):
            off = pl.multiple_of(t * k2, 128)
            channel(t, tmp_ref[:, pl.ds(off, k2)])


def biaffine_pallas(x, y, weight, bias_x=True, bias_y=True, o_tile=None,
                    compute_dtype=None):
    """x: [B, Lx, n_in], y: [B, Ly, n_in], weight: [n_out, n_in+bias_x, n_in+bias_y].
    Returns s: [B, n_out, Lx, Ly] (same semantics as the PyTorch einsum path)."""
    B, Lx, n_in = x.shape
    By, Ly, n_in_y = y.shape
    assert By == B and n_in_y == n_in
    O, Dx, Dy = weight.shape
    assert Dx == n_in + int(bias_x) and Dy == n_in + int(bias_y)

    out_dtype = x.dtype
    if compute_dtype is not None:                    # optional MXU-native bf16 path
        x = x.astype(compute_dtype)
        y = y.astype(compute_dtype)
        weight = weight.astype(compute_dtype)
    in_dt = x.dtype
    w_dt = weight.dtype
    in_sz, w_sz = in_dt.itemsize, w_dt.itemsize
    out_sz = jnp.dtype(out_dtype).itemsize

    # ---- lane-dense padded geometry ---------------------------------------------
    K1 = _round_up(Dx, 128)                          # x width / W dim-1
    K2 = _round_up(Dy, 128)                          # y width / W dim-2 / tmp chunk width
    Ly_pad = _round_up(Ly, 128)                      # lane-dense output stores
    Lx_pad = _round_up(Lx, 8)

    # ---- generation-aware VMEM budget -> o_tile ----------------------------------
    try:
        vmem_cap = int(pltpu.get_tpu_info().vmem_capacity_bytes)
    except Exception:                                # pragma: no cover
        vmem_cap = 64 * 2**20                        # conservative (v7x per-core)
    cap_usable = max(8 * 2**20, min(int(vmem_cap * 0.85), vmem_cap - 8 * 2**20))
    headroom = 2 * 2**20

    fixed = 2 * (Lx_pad * K1 + Ly_pad * K2) * in_sz                 # 2x-buffered x + y
    per_o = (2 * K1 * K2 * w_sz                                     # 2x-buffered W slice
             + 2 * Lx_pad * Ly_pad * out_sz                         # 2x-buffered out slice
             + Lx_pad * K2 * in_sz                                  # tmp scratch slice
             + Lx_pad * K2 * 4)                                     # stage-1 f32 temp
    if o_tile is None:
        o_tile = (cap_usable - fixed - headroom) // max(per_o, 1)
    o_tile = int(max(1, min(int(o_tile), O, 8)))
    while O % o_tile:                                # keep the grid exact
        o_tile -= 1
    n_ot = O // o_tile

    # ---- residency: compare TOTAL refetched HBM bytes ----------------------------
    w_total_bytes = O * K1 * K2 * w_sz
    xy_total_bytes = (B * Lx_pad * K1 + B * Ly_pad * K2) * in_sz
    w_refetch = (B - 1) * w_total_bytes if n_ot > 1 else 0           # cost of batch-outer
    xy_refetch = (n_ot - 1) * xy_total_bytes if B > 1 else 0         # cost of weight-outer
    weight_outer = w_refetch > xy_refetch

    # ---- guarantee >=2 parallel grid steps (v7x has 2 TensorCores) ---------------
    split_lx = (B == 1 and n_ot == 1 and Lx > 8)
    if split_lx:
        Lx_pad = _round_up(Lx, 16)
        n_lx = 2
    else:
        n_lx = 1
    Lx_blk = Lx_pad // n_lx

    # ---- padded operands (built once in the wrapper) ------------------------------
    def _pad_act(a, L, Lp, K, use_bias):
        cols = [a]
        if use_bias:
            cols.append(jnp.ones(a.shape[:-1] + (1,), a.dtype))
        width = n_in + int(use_bias)
        if K > width:
            cols.append(jnp.zeros(a.shape[:-1] + (K - width,), a.dtype))
        a = jnp.concatenate(cols, axis=-1)
        if Lp > L:
            a = jnp.pad(a, ((0, 0), (0, Lp - L), (0, 0)))
        return a

    x_pad = _pad_act(x, Lx, Lx_pad, K1, bias_x)                      # [B, Lx_pad, K1]
    y_pad = _pad_act(y, Ly, Ly_pad, K2, bias_y)                      # [B, Ly_pad, K2]
    w_full = jnp.zeros((O, K1, K2), w_dt).at[:, :Dx, :Dy].set(weight)
    w_flat = jnp.transpose(w_full, (1, 0, 2)).reshape(K1, O * K2)    # channel-contiguous

    # ---- grid / index maps --------------------------------------------------------
    if weight_outer:
        grid = (n_ot, B, n_lx)
        x_map = lambda ot, b, lx: (b, lx, 0)
        y_map = lambda ot, b, lx: (b, 0, 0)
        w_map = lambda ot, b, lx: (0, ot)
        out_map = lambda ot, b, lx: (b, ot, lx, 0)
        w_varies_inner = False
    else:
        grid = (B, n_ot, n_lx)
        x_map = lambda b, ot, lx: (b, lx, 0)
        y_map = lambda b, ot, lx: (b, 0, 0)
        w_map = lambda b, ot, lx: (0, ot)
        out_map = lambda b, ot, lx: (b, ot, lx, 0)
        w_varies_inner = n_ot > 1

    # ---- VMEM accounting + always-on vmem limit -----------------------------------
    w_blk = K1 * o_tile * K2 * w_sz
    total_est = (2 * (Lx_blk * K1 + Ly_pad * K2) * in_sz
                 + 2 * w_blk
                 + 2 * o_tile * Lx_blk * Ly_pad * out_sz
                 + Lx_blk * o_tile * K2 * in_sz          # tmp scratch
                 + Lx_blk * o_tile * K2 * 4)             # stage-1 f32 temp
    use_buf3 = (w_varies_inner and n_ot >= 3
                and total_est + w_blk + headroom <= cap_usable)
    if use_buf3:
        total_est += w_blk
        w_spec = pl.BlockSpec((K1, o_tile * K2), w_map, pipeline_mode=pl.Buffered(3))
    else:
        w_spec = pl.BlockSpec((K1, o_tile * K2), w_map)
    vmem_limit = int(min(max(total_est + 4 * 2**20, 32 * 2**20), vmem_cap))

    # ---- advisory cost estimate ----------------------------------------------------
    flops = 2 * B * O * Lx_pad * K2 * (K1 + Ly_pad)
    out_bytes = B * O * Lx_pad * Ly_pad * out_sz
    if weight_outer:
        bytes_accessed = w_total_bytes + n_ot * xy_total_bytes + out_bytes
    else:
        bytes_accessed = xy_total_bytes + (B if n_ot > 1 else 1) * w_total_bytes + out_bytes
    cost = pl.CostEstimate(flops=int(flops), transcendentals=0,
                           bytes_accessed=int(bytes_accessed))

    kernel = functools.partial(_biaffine_kernel, o_tile=o_tile, k2=K2)
    out_pad = pl.pallas_call(
        kernel,
        out_shape=jax.ShapeDtypeStruct((B, O, Lx_pad, Ly_pad), out_dtype),
        grid_spec=pltpu.PrefetchScalarGridSpec(
            num_scalar_prefetch=0,
            grid=grid,
            in_specs=[
                pl.BlockSpec((1, Lx_blk, K1), x_map),
                pl.BlockSpec((1, Ly_pad, K2), y_map),
                w_spec,
            ],
            out_specs=pl.BlockSpec((1, o_tile, Lx_blk, Ly_pad), out_map),
            scratch_shapes=[pltpu.VMEM((Lx_blk, o_tile * K2), in_dt)],
        ),
        compiler_params=pltpu.CompilerParams(
            dimension_semantics=("parallel", "parallel", "parallel"),
            vmem_limit_bytes=vmem_limit,
        ),
        cost_estimate=cost,
    )(x_pad, y_pad, w_flat)

    return out_pad[:, :, :Lx, :Ly]


if __name__ == "__main__":
    # Small shapes implied by the module: batch=2, seq=8, hidden(n_in)=32, n_out=2.
    B, L, n_in, n_out = 2, 8, 32, 2

    key = jax.random.PRNGKey(0)
    kx, ky, kw, kw2, kw3 = jax.random.split(key, 5)
    x = jax.random.normal(kx, (B, L, n_in), dtype=jnp.float32)
    y = jax.random.normal(ky, (B, L, n_in), dtype=jnp.float32)

    # Module's init_weights() zeros the weight; use a deterministic non-zero weight
    # so the compute path is actually exercised.
    w = 0.1 * jax.random.normal(kw, (n_out, n_in + 1, n_in + 1), dtype=jnp.float32)

    # Pure-JAX reference (same semantics as the torch.einsum path).
    xb = jnp.concatenate([x, jnp.ones_like(x[..., :1])], axis=-1)
    yb = jnp.concatenate([y, jnp.ones_like(y[..., :1])], axis=-1)
    ref = jnp.einsum("bxi,oij,byj->boxy", xb, w, yb)

    out = jax.block_until_ready(biaffine_pallas(x, y, w, bias_x=True, bias_y=True))
    assert out.shape == (B, n_out, L, L)
    assert jnp.allclose(out, ref, atol=1e-4, rtol=1e-4)

    # bias_y=False path.
    w2 = 0.1 * jax.random.normal(kw2, (n_out, n_in + 1, n_in), dtype=jnp.float32)
    out2 = jax.block_until_ready(biaffine_pallas(x, y, w2, bias_x=True, bias_y=False))
    ref2 = jnp.einsum("bxi,oij,byj->boxy", xb, w2, y)
    assert jnp.allclose(out2, ref2, atol=1e-4, rtol=1e-4)

    # bf16 compute path (MXU-native); loose tolerance for the rounded tmp/y operands.
    out_bf16 = jax.block_until_ready(
        biaffine_pallas(x, y, w, bias_x=True, bias_y=True, compute_dtype=jnp.bfloat16))
    assert out_bf16.dtype == jnp.float32
    assert jnp.allclose(out_bf16, ref, atol=1e-1, rtol=1e-1)

    # Megacore path: B==1 and a single o-tile triggers the Lx split (2 parallel blocks).
    B1, L1, O1 = 1, 24, 1
    x1 = jax.random.normal(kx, (B1, L1, n_in), dtype=jnp.float32)
    y1 = jax.random.normal(ky, (B1, L1, n_in), dtype=jnp.float32)
    w3 = 0.1 * jax.random.normal(kw3, (O1, n_in + 1, n_in + 1), dtype=jnp.float32)
    x1b = jnp.concatenate([x1, jnp.ones_like(x1[..., :1])], axis=-1)
    y1b = jnp.concatenate([y1, jnp.ones_like(y1[..., :1])], axis=-1)
    ref3 = jnp.einsum("bxi,oij,byj->boxy", x1b, w3, y1b)
    out3 = jax.block_until_ready(biaffine_pallas(x1, y1, w3))
    assert jnp.allclose(out3, ref3, atol=1e-4, rtol=1e-4)

    print("KERNEL_OK")
</pallas_src>

<mosaic_0001>
module attributes {stable_mosaic.version = 11 : i64} {
  func.func @_biaffine_kernel(%arg0: i32, %arg1: i32, %arg2: i32, %arg3: memref<1x8x128xf32, #tpu.memory_space<vmem>>, %arg4: memref<1x128x128xf32, #tpu.memory_space<vmem>>, %arg5: memref<128x256xf32, #tpu.memory_space<vmem>>, %arg6: memref<1x2x8x128xf32, #tpu.memory_space<vmem>>, %arg7: memref<8x256xf32, #tpu.memory_space<vmem>>) attributes {dimension_semantics = [#tpu.dimension_semantics<parallel>, #tpu.dimension_semantics<parallel>, #tpu.dimension_semantics<parallel>], iteration_bounds = array<i64: 2, 1, 1>, scalar_prefetch = 0 : i64, scratch_operands = 1 : i64, tpu.core_type = #tpu.core_type<tc>, window_params = [{transform_indices = @transform_0, window_bounds = array<i64: 1, 8, 128>}, {transform_indices = @transform_1, window_bounds = array<i64: 1, 128, 128>}, {transform_indices = @transform_2, window_bounds = array<i64: 128, 256>}, {transform_indices = @transform_3, window_bounds = array<i64: 1, 2, 8, 128>}]} {
    %c0 = arith.constant 0 : index
    %c0_0 = arith.constant 0 : index
    %c0_1 = arith.constant 0 : index
    %0 = vector.load %arg3[%c0, %c0_0, %c0_1] : memref<1x8x128xf32, #tpu.memory_space<vmem>>, vector<1x8x128xf32>
    %1 = vector.shape_cast %0 : vector<1x8x128xf32> to vector<8x128xf32>
    %c0_2 = arith.constant 0 : index
    %c0_3 = arith.constant 0 : index
    %2 = vector.load %arg5[%c0_2, %c0_3] : memref<128x256xf32, #tpu.memory_space<vmem>>, vector<128x256xf32>
    %cst = arith.constant dense<0.000000e+00> : vector<8x256xf32>
    %3 = tpu.matmul %1, %2, %cst {dimension_numbers = #tpu.dot_dimension_numbers<[1], [0], [0], [1], [0, 0, 1, 1], [], []>} : vector<8x128xf32>, vector<128x256xf32>, vector<8x256xf32> -> vector<8x256xf32>
    %c0_4 = arith.constant 0 : index
    %c0_5 = arith.constant 0 : index
    %4 = vector.load %arg7[%c0_4, %c0_5] : memref<8x256xf32, #tpu.memory_space<vmem>>, vector<8x256xf32>
    tpu.vector_store %arg7[%c0_4, %c0_5], %3 {strides = array<i32>} : memref<8x256xf32, #tpu.memory_space<vmem>>, vector<8x256xf32>,
    %c0_6 = arith.constant 0 : index
    %c0_7 = arith.constant 0 : index
    %c0_8 = arith.constant 0 : index
    %5 = vector.load %arg4[%c0_6, %c0_7, %c0_8] : memref<1x128x128xf32, #tpu.memory_space<vmem>>, vector<1x128x128xf32>
    %6 = vector.shape_cast %5 : vector<1x128x128xf32> to vector<128x128xf32>
    %c0_9 = arith.constant 0 : index
    %c0_10 = arith.constant 0 : index
    %7 = vector.load %arg7[%c0_9, %c0_10] : memref<8x256xf32, #tpu.memory_space<vmem>>, vector<8x128xf32>
    %cst_11 = arith.constant dense<0.000000e+00> : vector<8x128xf32>
    %8 = tpu.matmul %7, %6, %cst_11 {dimension_numbers = #tpu.dot_dimension_numbers<[1], [1], [0], [0], [0, 0, 1, 0], [], []>} : vector<8x128xf32>, vector<128x128xf32>, vector<8x128xf32> -> vector<8x128xf32>
    %c0_12 = arith.constant 0 : index
    %c0_13 = arith.constant 0 : index
    %c0_14 = arith.constant 0 : index
    %c0_15 = arith.constant 0 : index
    %9 = vector.load %arg6[%c0_12, %c0_13, %c0_14, %c0_15] : memref<1x2x8x128xf32, #tpu.memory_space<vmem>>, vector<1x1x8x128xf32>
    %10 = vector.shape_cast %9 : vector<1x1x8x128xf32> to vector<8x128xf32>
    %11 = vector.shape_cast %8 : vector<8x128xf32> to vector<1x1x8x128xf32>
    tpu.vector_store %arg6[%c0_12, %c0_13, %c0_14, %c0_15], %11 {strides = array<i32>} : memref<1x2x8x128xf32, #tpu.memory_space<vmem>>, vector<1x1x8x128xf32>,
    %c0_16 = arith.constant 0 : index
    %c128 = arith.constant 128 : index
    %12 = vector.load %arg7[%c0_16, %c128] : memref<8x256xf32, #tpu.memory_space<vmem>>, vector<8x128xf32>
    %cst_17 = arith.constant dense<0.000000e+00> : vector<8x128xf32>
    %13 = tpu.matmul %12, %6, %cst_17 {dimension_numbers = #tpu.dot_dimension_numbers<[1], [1], [0], [0], [0, 0, 1, 0], [], []>} : vector<8x128xf32>, vector<128x128xf32>, vector<8x128xf32> -> vector<8x128xf32>
    %c0_18 = arith.constant 0 : index
    %c1 = arith.constant 1 : index
    %c0_19 = arith.constant 0 : index
    %c0_20 = arith.constant 0 : index
    %14 = vector.load %arg6[%c0_18, %c1, %c0_19, %c0_20] : memref<1x2x8x128xf32, #tpu.memory_space<vmem>>, vector<1x1x8x128xf32>
    %15 = vector.shape_cast %14 : vector<1x1x8x128xf32> to vector<8x128xf32>
    %16 = vector.shape_cast %13 : vector<8x128xf32> to vector<1x1x8x128xf32>
    tpu.vector_store %arg6[%c0_18, %c1, %c0_19, %c0_20], %16 {strides = array<i32>} : memref<1x2x8x128xf32, #tpu.memory_space<vmem>>, vector<1x1x8x128xf32>,
    return
  }
  func.func @transform_0(%arg0: i32, %arg1: i32, %arg2: i32) -> (i32, i32, i32) {
    %c0_i32 = arith.constant 0 : i32
    %c0_i32_0 = arith.constant 0 : i32
    return %arg0, %arg2, %c0_i32 : i32, i32, i32
  }
  func.func @transform_1(%arg0: i32, %arg1: i32, %arg2: i32) -> (i32, i32, i32) {
    %c0_i32 = arith.constant 0 : i32
    %c0_i32_0 = arith.constant 0 : i32
    %c0_i32_1 = arith.constant 0 : i32
    return %arg0, %c0_i32, %c0_i32_0 : i32, i32, i32
  }
  func.func @transform_2(%arg0: i32, %arg1: i32, %arg2: i32) -> (i32, i32) {
    %c0_i32 = arith.constant 0 : i32
    %c0_i32_0 = arith.constant 0 : i32
    return %c0_i32, %arg1 : i32, i32
  }
  func.func @transform_3(%arg0: i32, %arg1: i32, %arg2: i32) -> (i32, i32, i32, i32) {
    %c0_i32 = arith.constant 0 : i32
    %c0_i32_0 = arith.constant 0 : i32
    return %arg0, %arg1, %arg2, %c0_i32 : i32, i32, i32, i32
  }
}

</mosaic_0001>

<llo_original>
// kernel: tpu_custom_call.1
$region0: #{tpu_custom_call.1}
  #allocation0 [shape = 'u32[]', space=smem, size = 0x4, offset = 0x4, fixed_abs, tag = 'smem constant byte address 0x4 - core index']
  #allocation1 [shape = 'u32[144,128]{1,0:T(1,128)}', space=vmem, size = 0x12000, scoped, tag = 'internal scratch']
  #allocation2 [shape = 'f32[8,256]{1,0:T(8,128)}', space=vmem, size = 0x2000, scoped, tag = 'scratch operand']
  %s0 = inlined_call_operand.hbm [shape: f32[2,8,128], index: 0, kind: input, shape index: {}]
  %s1 = inlined_call_operand.hbm [shape: f32[2,128,128], index: 1, kind: input, shape index: {}]
  %s2 = inlined_call_operand.hbm [shape: f32[128,256], index: 2, kind: input, shape index: {}]
  %s3 = inlined_call_operand.hbm [shape: f32[2,2,8,128], index: 3, kind: output, shape index: {}]
  %s4 = sld [smem:[#allocation0]]
  $region57: #{tpu_custom_call.1} parent=0
    _
  %s6 = ssub.s32 1, %s4
  %s7 = scalar_select 0, %s6, %s4
  $region1: #{tpu_custom_call.1} parent=0
    #allocation3 [shape = 'u8[8192]{0}', space=vmem, size = 0x2000, scoped, tag = 'input window, operand 0']
    #allocation4 [shape = 's32[2]{0}', space=sflag, size = 0x8, scoped, tag = 'scoped memory for tpu_custom_call.1']
    #allocation5 [shape = 's32[2]{0}', space=sflag, size = 0x8, scoped, tag = 'scoped memory for tpu_custom_call.1']
    #allocation6 [shape = 'u8[131072]{0}', space=vmem, size = 0x20000, scoped, tag = 'input window, operand 1']
    #allocation7 [shape = 's32[2]{0}', space=sflag, size = 0x8, scoped, tag = 'scoped memory for tpu_custom_call.1']
    #allocation8 [shape = 'u8[131072]{0}', space=vmem, size = 0x20000, scoped, tag = 'input window, operand 2, single buffered']
    #allocation9 [shape = 'u8[16384]{0}', space=vmem, size = 0x4000, scoped, tag = 'output window, operand 0']
    %8 = vsyncpa [#allocation4], 0
    %s9 = scalar_lea.sflag [#allocation4], 1
    %10 = vsyncpa %s9, 0
    %11 = vsyncpa [#allocation7], 0
    %s12 = scalar_lea.sflag [#allocation7], 1
    %13 = vsyncpa %s12, 0
    %14 = vsyncpa [#allocation5], 0
    %s15 = scalar_lea.sflag [#allocation5], 1
    %16 = vsyncpa %s15, 0
    loop: start=0, step=1, limit=4
    $region2: #{tpu_custom_call.1} parent=1 // loop_pre_header
      _
    $region3: #{tpu_custom_call.1} parent=1 // loop_header
      %s18 = sphi 0, %s22
      %p19 = scmp.ge.s32.totalorder %s18, 4
      %s25 = sphi 0, %s44
      %s26 = sphi 0, %s40
      %s27 = sphi 0, %s36
      %s28 = sphi 0, %s25
      %s29 = sphi 0, %s26
      %s30 = sphi 0, %s27
      %s31 = sphi 0, %s28
      %s32 = sphi 0, %s29
      %s33 = sphi 0, %s30
      %s49 = sphi 0, %s51
      %s52 = sphi 0, %s49
      %s53 = sphi 0, %s52
      %s69 = sphi 0, %s53
      %s75 = sphi 0, %s77
      %s78 = sphi 0, %s75
      %s79 = sphi 0, %s78
      %s95 = sphi 0, %s79
      %s101 = sphi 0, %s103
      %s104 = sphi 0, %s101
      %s105 = sphi 0, %s104
      %s121 = sphi 0, %s105
      %s131 = sphi 0, %s133
      %s134 = sphi 0, %s131
      %s135 = sphi 0, %s134
      %s151 = sphi 0, %s135
    $region4: #{tpu_custom_call.1} parent=1 // loop_header_branch
      %21 = sbr.rel (%p19) target = $region8
    $region5: #{tpu_custom_call.1} parent=1 // loop_body
      %s23 = ssub.s32 %s18, 1
      %s24 = ssub.s32 %s18, 2
      %s34 = sadd.s32 1, %s27
      %p35 = scmp.ge.s32.totalorder %s34, 1
      %s36 = scalar_select %p35, 0, %s34
      %s37 = sadd.s32 1, %s26
      %s38 = scalar_select %p35, %s37, %s26
      %p39 = scmp.ge.s32.totalorder %s38, 1
      %s40 = scalar_select %p39, 0, %s38
      %s41 = sadd.s32 1, %s25
      %s42 = scalar_select %p39, %s41, %s25
      %p43 = scmp.ge.s32.totalorder %s42, 2
      %s44 = scalar_select %p43, 0, %s42
      %s45 = ssub.s32 %s25, %s44
      %s46 = ssub.s32 %s27, %s36
      %s47 = sor.u32 %s45, %s46
      %p48 = scmp.eq.s32.totalorder %s47, 0
      %s50 = sadd.s32 %s49, 1
      %s51 = scalar_select %p48, %s49, %s50
      %p54 = pneg %p48
      %p55 = scmp.eq.s32.totalorder %s18, 1
      %p56 = por %p54, %p55
      %p57 = scmp.ne.s32.totalorder %s49, %s52
      %p58 = scmp.eq.s32.totalorder %s18, 0
      %p59 = por %p57, %p58
      %p60 = scmp.ne.s32.totalorder %s49, %s52
      %p61 = scmp.eq.s32.totalorder %s23, 1
      %p62 = por %p60, %p61
      %p63 = scmp.ne.s32.totalorder %s52, %s53
      %p64 = scmp.eq.s32.totalorder %s23, 0
      %p65 = por %p63, %p64
      %p66 = scmp.ne.s32.totalorder %s52, %s53
      %p67 = scmp.eq.s32.totalorder %s24, 1
      %p68 = por %p66, %p67
      %p70 = scmp.ne.s32.totalorder %s53, %s69
      %p71 = scmp.eq.s32.totalorder %s24, 0
      %p72 = por %p70, %p71
      %s73 = ssub.s32 %s25, %s44
      %p74 = scmp.eq.s32.totalorder %s73, 0
      %s76 = sadd.s32 %s75, 1
      %s77 = scalar_select %p74, %s75, %s76
      %p80 = pneg %p74
      %p81 = scmp.eq.s32.totalorder %s18, 1
      %p82 = por %p80, %p81
      %p83 = scmp.ne.s32.totalorder %s75, %s78
      %p84 = scmp.eq.s32.totalorder %s18, 0
      %p85 = por %p83, %p84
      %p86 = scmp.ne.s32.totalorder %s75, %s78
      %p87 = scmp.eq.s32.totalorder %s23, 1
      %p88 = por %p86, %p87
      %p89 = scmp.ne.s32.totalorder %s78, %s79
      %p90 = scmp.eq.s32.totalorder %s23, 0
      %p91 = por %p89, %p90
      %p92 = scmp.ne.s32.totalorder %s78, %s79
      %p93 = scmp.eq.s32.totalorder %s24, 1
      %p94 = por %p92, %p93
      %p96 = scmp.ne.s32.totalorder %s79, %s95
      %p97 = scmp.eq.s32.totalorder %s24, 0
      %p98 = por %p96, %p97
      %s99 = ssub.s32 %s26, %s40
      %p100 = scmp.eq.s32.totalorder %s99, 0
      %s102 = sadd.s32 %s101, 1
      %s103 = scalar_select %p100, %s101, %s102
      %p106 = pneg %p100
      %p107 = scmp.eq.s32.totalorder %s18, 1
      %p108 = por %p106, %p107
      %p109 = scmp.ne.s32.totalorder %s101, %s104
      %p110 = scmp.eq.s32.totalorder %s18, 0
      %p111 = por %p109, %p110
      %p112 = scmp.ne.s32.totalorder %s101, %s104
      %p113 = scmp.eq.s32.totalorder %s23, 1
      %p114 = por %p112, %p113
      %p115 = scmp.ne.s32.totalorder %s104, %s105
      %p116 = scmp.eq.s32.totalorder %s23, 0
      %p117 = por %p115, %p116
      %p118 = scmp.ne.s32.totalorder %s104, %s105
      %p119 = scmp.eq.s32.totalorder %s24, 1
      %p120 = por %p118, %p119
      %p122 = scmp.ne.s32.totalorder %s105, %s121
      %p123 = scmp.eq.s32.totalorder %s24, 0
      %p124 = por %p122, %p123
      %s125 = ssub.s32 %s25, %s44
      %s126 = ssub.s32 %s26, %s40
      %s127 = sor.u32 %s125, %s126
      %s128 = ssub.s32 %s27, %s36
      %s129 = sor.u32 %s127, %s128
      %p130 = scmp.eq.s32.totalorder %s129, 0
      %s132 = sadd.s32 %s131, 1
      %s133 = scalar_select %p130, %s131, %s132
      %p136 = pneg %p130
      %p137 = scmp.eq.s32.totalorder %s18, 1
      %p138 = por %p136, %p137
      %p139 = scmp.ne.s32.totalorder %s131, %s134
      %p140 = scmp.eq.s32.totalorder %s18, 0
      %p141 = por %p139, %p140
      %p142 = scmp.ne.s32.totalorder %s131, %s134
      %p143 = scmp.eq.s32.totalorder %s23, 1
      %p144 = por %p142, %p143
      %p145 = scmp.ne.s32.totalorder %s134, %s135
      %p146 = scmp.eq.s32.totalorder %s23, 0
      %p147 = por %p145, %p146
      %p148 = scmp.ne.s32.totalorder %s134, %s135
      %p149 = scmp.eq.s32.totalorder %s24, 1
      %p150 = por %p148, %p149
      %p152 = scmp.ne.s32.totalorder %s135, %s151
      %p153 = scmp.eq.s32.totalorder %s24, 0
      %p154 = por %p152, %p153
      %p155 = scmp.le.s32.totalorder 1, %s18
      %p156 = scmp.lt.s32.totalorder %s18, 3
      %p157 = pnand %p155, %p156
      %p158 = pneg %p157
      // Predicated region
      $region9: #{tpu_custom_call.1} parent=5 // pred_check
        _
      $region10: #{tpu_custom_call.1} parent=5 // pred_check_branch
        %160 = sbr.rel (%p157) target = $region12
      $region11: #{tpu_custom_call.1} parent=5 // pred_region
        %s161 = ssub.s32 %s18, 1
        // Predicated region
        $region13: #{tpu_custom_call.1} parent=11 // pred_check
          %p162 = pneg %p117
        $region14: #{tpu_custom_call.1} parent=11 // pred_check_branch
          %164 = sbr.rel (%p162) target = $region16
        $region15: #{tpu_custom_call.1} parent=11 // pred_region
          %s165 = smul.u32 2, %s29
          %s167 = ssub.s32 4096, 4096
          %168 = vsyncadd [#allocation7], %s167
          %s169 = smul.addr %s165, 128
          %s170 = scalar_lea.hbm %s2, %s169
          %s171 = sshll.u32 [#allocation8], 4
          %s172 = int_to_ptr.vmem [resolvable:$true] %s171
          %177 = dma.hbm_to_vmem [thread:$0]  %s170, 4096, %s172, [#allocation7], 256, 256, 16
        $region16: #{tpu_custom_call.1} parent=11 // pred_fallthru
          _
      $region12: #{tpu_custom_call.1} parent=5 // pred_fallthru
        _
      %p178 = scmp.lt.s32.totalorder %s18, 2
      // Predicated region
      $region17: #{tpu_custom_call.1} parent=5 // pred_check
        %p179 = pneg %p178
      $region18: #{tpu_custom_call.1} parent=5 // pred_check_branch
        %181 = sbr.rel (%p179) target = $region20
      $region19: #{tpu_custom_call.1} parent=5 // pred_region
        // Predicated region
        $region21: #{tpu_custom_call.1} parent=19 // pred_check
          %p182 = pneg %p59
        $region22: #{tpu_custom_call.1} parent=19 // pred_check_branch
          %184 = sbr.rel (%p182) target = $region24
        $region23: #{tpu_custom_call.1} parent=19 // pred_region
          %s185 = sand.u32 %s49, 1
          %s186 = scalar_lea.sflag [#allocation4], %s185
          %s187 = sand.u32 %s49, 1
          %s188 = smul.addr %s187, 8
          %s189 = scalar_lea.vmem [#allocation3], %s188
          %s191 = ssub.s32 128, 128
          %192 = vsyncadd %s186, %s191
          %s193 = sadd.s32 %s27, %s25
          %s194 = smul.addr %s193, 128
          %s195 = scalar_lea.hbm %s0, %s194
          %s197 = sshll.u32 %s189, 4
          %s198 = int_to_ptr.vmem [resolvable:$true] %s197
          %200 = dma.hbm_to_vmem [thread:$0]  %s195, 128, %s198, %s186
        $region24: #{tpu_custom_call.1} parent=19 // pred_fallthru
          _
        // Predicated region
        $region25: #{tpu_custom_call.1} parent=19 // pred_check
          %p201 = pneg %p85
        $region26: #{tpu_custom_call.1} parent=19 // pred_check_branch
          %203 = sbr.rel (%p201) target = $region28
        $region27: #{tpu_custom_call.1} parent=19 // pred_region
          %s204 = sand.u32 %s18, 1
          %s205 = scalar_lea.sflag [#allocation7], %s204
          %s206 = sand.u32 %s75, 1
          %s207 = smul.addr %s206, 128
          %s208 = scalar_lea.vmem [#allocation6], %s207
          %s210 = ssub.s32 2048, 2048
          %211 = vsyncadd %s205, %s210
          %s212 = smul.addr %s25, 16
          %s213 = smul.addr %s212, 128
          %s214 = scalar_lea.hbm %s1, %s213
          %s215 = sshll.u32 %s208, 4
          %s216 = int_to_ptr.vmem [resolvable:$true] %s215
          %221 = dma.hbm_to_vmem [thread:$0]  %s214, 2048, %s216, %s205, 128, 128, 8
        $region28: #{tpu_custom_call.1} parent=19 // pred_fallthru
          _
      $region20: #{tpu_custom_call.1} parent=5 // pred_fallthru
        _
      %p222 = scmp.le.s32.totalorder 1, %s18
      %p223 = scmp.lt.s32.totalorder %s18, 3
      %p224 = pnand %p222, %p223
      %p225 = pneg %p224
      // Predicated region
      $region29: #{tpu_custom_call.1} parent=5 // pred_check
        _
      $region30: #{tpu_custom_call.1} parent=5 // pred_check_branch
        %227 = sbr.rel (%p224) target = $region32
      $region31: #{tpu_custom_call.1} parent=5 // pred_region
        %s228 = ssub.s32 %s18, 1
        %s229 = sand.u32 %s52, 1
        %s230 = scalar_lea.sflag [#allocation4], %s229
        %s231 = sand.u32 %s52, 1
        %s232 = smul.addr %s231, 8
        %s233 = scalar_lea.vmem [#allocation3], %s232
        // Predicated region
        $region33: #{tpu_custom_call.1} parent=31 // pred_check
          %p234 = pneg %p65
        $region34: #{tpu_custom_call.1} parent=31 // pred_check_branch
          %236 = sbr.rel (%p234) target = $region36
        $region35: #{tpu_custom_call.1} parent=31 // pred_region
          %237 = dma.done %s230, 128
        $region36: #{tpu_custom_call.1} parent=31 // pred_fallthru
          _
        %s238 = sand.u32 %s23, 1
        %s239 = scalar_lea.sflag [#allocation7], %s238
        %s240 = sand.u32 %s78, 1
        %s241 = smul.addr %s240, 128
        %s242 = scalar_lea.vmem [#allocation6], %s241
        // Predicated region
        $region37: #{tpu_custom_call.1} parent=31 // pred_check
          %p243 = pneg %p91
        $region38: #{tpu_custom_call.1} parent=31 // pred_check_branch
          %245 = sbr.rel (%p243) target = $region40
        $region39: #{tpu_custom_call.1} parent=31 // pred_region
          %246 = dma.done %s239, 2048
        $region40: #{tpu_custom_call.1} parent=31 // pred_fallthru
          _
        // Predicated region
        $region41: #{tpu_custom_call.1} parent=31 // pred_check
          %p247 = pneg %p117
        $region42: #{tpu_custom_call.1} parent=31 // pred_check_branch
          %249 = sbr.rel (%p247) target = $region44
        $region43: #{tpu_custom_call.1} parent=31 // pred_region
          %250 = dma.done [#allocation7], 4096
        $region44: #{tpu_custom_call.1} parent=31 // pred_fallthru
          _
        %s251 = sand.u32 %s52, 1
        %s252 = scalar_lea.sflag [#allocation4], %s251
        %s253 = sand.u32 %s52, 1
        %s254 = smul.addr %s253, 8
        %s255 = scalar_lea.vmem [#allocation3], %s254
        %p256 = pneg %p65
        %p257 = pneg %p62
        %s258 = sand.u32 %s23, 1
        %s259 = scalar_lea.sflag [#allocation7], %s258
        %s260 = sand.u32 %s78, 1
        %s261 = smul.addr %s260, 128
        %s262 = scalar_lea.vmem [#allocation6], %s261
        %p263 = pneg %p91
        %p264 = pneg %p88
        %p265 = pneg %p117
        %p266 = pneg %p114
        %p267 = pneg %p147
        %p268 = pneg %p144
        %s269 = sand.u32 %s134, 1
        %s270 = scalar_lea.sflag [#allocation5], %s269
        %s271 = sand.u32 %s134, 1
        %s272 = smul.addr %s271, 16
        %s273 = scalar_lea.vmem [#allocation9], %s272
        %s274 = smul.u32 2, %s29
        %s275 = smul.u32 2, %s29
        %v276 = vld [vmem:[%s233] sm:$0xff]
        %v277 = vld [vmem:[#allocation8] sm:$0xff]
        %v278 = vld [vmem:[#allocation8 + $0x8] sm:$0xff]
        %v279 = vld [vmem:[#allocation8 + $0x10] sm:$0xff]
        %v280 = vld [vmem:[#allocation8 + $0x18] sm:$0xff]
        %v281 = vld [vmem:[#allocation8 + $0x20] sm:$0xff]
        %v282 = vld [vmem:[#allocation8 + $0x28] sm:$0xff]
        %v283 = vld [vmem:[#allocation8 + $0x30] sm:$0xff]
        %v284 = vld [vmem:[#allocation8 + $0x38] sm:$0xff]
        %v285 = vld [vmem:[#allocation8 + $0x40] sm:$0xff]
        %v286 = vld [vmem:[#allocation8 + $0x48] sm:$0xff]
        %v287 = vld [vmem:[#allocation8 + $0x50] sm:$0xff]
        %v288 = vld [vmem:[#allocation8 + $0x58] sm:$0xff]
        %v289 = vld [vmem:[#allocation8 + $0x60] sm:$0xff]
        %v290 = vld [vmem:[#allocation8 + $0x68] sm:$0xff]
        %v291 = vld [vmem:[#allocation8 + $0x70] sm:$0xff]
        %v292 = vld [vmem:[#allocation8 + $0x78] sm:$0xff]
        %v293 = vld [vmem:[#allocation8 + $0x80] sm:$0xff]
        %v294 = vld [vmem:[#allocation8 + $0x88] sm:$0xff]
        %v295 = vld [vmem:[#allocation8 + $0x90] sm:$0xff]
        %v296 = vld [vmem:[#allocation8 + $0x98] sm:$0xff]
        %v297 = vld [vmem:[#allocation8 + $0xa0] sm:$0xff]
        %v298 = vld [vmem:[#allocation8 + $0xa8] sm:$0xff]
        %v299 = vld [vmem:[#allocation8 + $0xb0] sm:$0xff]
        %v300 = vld [vmem:[#allocation8 + $0xb8] sm:$0xff]
        %v301 = vld [vmem:[#allocation8 + $0xc0] sm:$0xff]
        %v302 = vld [vmem:[#allocation8 + $0xc8] sm:$0xff]
        %v303 = vld [vmem:[#allocation8 + $0xd0] sm:$0xff]
        %v304 = vld [vmem:[#allocation8 + $0xd8] sm:$0xff]
        %v305 = vld [vmem:[#allocation8 + $0xe0] sm:$0xff]
        %v306 = vld [vmem:[#allocation8 + $0xe8] sm:$0xff]
        %v307 = vld [vmem:[#allocation8 + $0xf0] sm:$0xff]
        %v308 = vld [vmem:[#allocation8 + $0xf8] sm:$0xff]
        %309 = vmatprep.subr.mxu0 %v278
        %310 = vmatpush1.msra.mxu0 %v277
        %311 = vmatprep.subr.mxu0 %v280
        %312 = vmatpush1.msra.mxu0 %v279
        %313 = vmatprep.subr.mxu0 %v282
        %314 = vmatpush1.msra.mxu0 %v281
        %315 = vmatprep.subr.mxu0 %v284
        %316 = vmatpush1.msra.mxu0 %v283
        %317 = vmatprep.subr.mxu0 %v286
        %318 = vmatpush1.msra.mxu0 %v285
        %319 = vmatprep.subr.mxu0 %v288
        %320 = vmatpush1.msra.mxu0 %v287
        %321 = vmatprep.subr.mxu0 %v290
        %322 = vmatpush1.msra.mxu0 %v289
        %323 = vmatprep.subr.mxu0 %v292
        %324 = vmatpush1.msra.mxu0 %v291
        %325 = vmatprep.subr.mxu0 %v294
        %326 = vmatpush1.msra.mxu0 %v293
        %327 = vmatprep.subr.mxu0 %v296
        %328 = vmatpush1.msra.mxu0 %v295
        %329 = vmatprep.subr.mxu0 %v298
        %330 = vmatpush1.msra.mxu0 %v297
        %331 = vmatprep.subr.mxu0 %v300
        %332 = vmatpush1.msra.mxu0 %v299
        %333 = vmatprep.subr.mxu0 %v302
        %334 = vmatpush1.msra.mxu0 %v301
        %335 = vmatprep.subr.mxu0 %v304
        %336 = vmatpush1.msra.mxu0 %v303
        %337 = vmatprep.subr.mxu0 %v306
        %338 = vmatpush1.msra.mxu0 %v305
        %339 = vmatprep.subr.mxu0 %v308
        %340 = vmatpush1.msra.mxu0 %v307
        %341 = vmatprep.subr.mxu0 0.0
        %342 = vmatpush1.msra.mxu0 0.0
        %343 = vmatprep.subr.mxu0 0.0
        %344 = vmatpush1.msra.mxu0 0.0
        %345 = vmatprep.subr.mxu0 0.0
        %346 = vmatpush1.msra.mxu0 0.0
        %347 = vmatprep.subr.mxu0 0.0
        %348 = vmatpush1.msra.mxu0 0.0
        %349 = vmatprep.subr.mxu0 0.0
        %350 = vmatpush1.msra.mxu0 0.0
        %351 = vmatprep.subr.mxu0 0.0
        %352 = vmatpush1.msra.mxu0 0.0
        %353 = vmatprep.subr.mxu0 0.0
        %354 = vmatpush1.msra.mxu0 0.0
        %355 = vmatprep.subr.mxu0 0.0
        %356 = vmatpush1.msra.mxu0 0.0
        %357 = vmatprep.subr.mxu0 0.0
        %358 = vmatpush1.msra.mxu0 0.0
        %359 = vmatprep.subr.mxu0 0.0
        %360 = vmatpush1.msra.mxu0 0.0
        %361 = vmatprep.subr.mxu0 0.0
        %362 = vmatpush1.msra.mxu0 0.0
        %363 = vmatprep.subr.mxu0 0.0
        %364 = vmatpush1.msra.mxu0 0.0
        %365 = vmatprep.subr.mxu0 0.0
        %366 = vmatpush1.msra.mxu0 0.0
        %367 = vmatprep.subr.mxu0 0.0
        %368 = vmatpush1.msra.mxu0 0.0
        %369 = vmatprep.subr.mxu0 0.0
        %370 = vmatpush1.msra.mxu0 0.0
        %371 = vmatprep.subr.mxu0 0.0
        %372 = vmatpush1.msra.mxu0 0.0
        %373 = vmatprep.mubr.f32.mxu0 0.0
        %374 = vmatmul.mubr.f32.gmra.mrb[0].mxu0 %v276
        %v375 = vpop.f32.mrb[0].mxu0
        %v376 = vadd.f32 0.0, %v375
        %v377 = vpop.f32.mrb[0].mxu0
        %v378 = vadd.f32 0.0, %v377
        %379 = vdwg.mxu0
        %380 = vst [vmem:[#allocation2] sm:$0xff] %v376
        %381 = vst [vmem:[#allocation2 + $0x8] sm:$0xff] %v378
        %v382 = vld [vmem:[%s242] sm:$0xff]
        %v383 = vld [vmem:[%s242 + $0x8] sm:$0xff]
        %v384 = vld [vmem:[%s242 + $0x10] sm:$0xff]
        %v385 = vld [vmem:[%s242 + $0x18] sm:$0xff]
        %v386 = vld [vmem:[%s242 + $0x20] sm:$0xff]
        %v387 = vld [vmem:[%s242 + $0x28] sm:$0xff]
        %v388 = vld [vmem:[%s242 + $0x30] sm:$0xff]
        %v389 = vld [vmem:[%s242 + $0x38] sm:$0xff]
        %v390 = vld [vmem:[%s242 + $0x40] sm:$0xff]
        %v391 = vld [vmem:[%s242 + $0x48] sm:$0xff]
        %v392 = vld [vmem:[%s242 + $0x50] sm:$0xff]
        %v393 = vld [vmem:[%s242 + $0x58] sm:$0xff]
        %v394 = vld [vmem:[%s242 + $0x60] sm:$0xff]
        %v395 = vld [vmem:[%s242 + $0x68] sm:$0xff]
        %v396 = vld [vmem:[%s242 + $0x70] sm:$0xff]
        %v397 = vld [vmem:[%s242 + $0x78] sm:$0xff]
        %v398 = vld [vmem:[#allocation2] sm:$0xff]
        %399 = vmatprep.subr.mxu0 0.0
        %400 = vmatpush1.xpose.msra.mxu0 %v382
        %401 = vmatprep.subr.mxu0 0.0
        %402 = vmatpush1.xpose.msra.mxu0 %v383
        %403 = vmatprep.subr.mxu0 0.0
        %404 = vmatpush1.xpose.msra.mxu0 %v384
        %405 = vmatprep.subr.mxu0 0.0
        %406 = vmatpush1.xpose.msra.mxu0 %v385
        %407 = vmatprep.subr.mxu0 0.0
        %408 = vmatpush1.xpose.msra.mxu0 %v386
        %409 = vmatprep.subr.mxu0 0.0
        %410 = vmatpush1.xpose.msra.mxu0 %v387
        %411 = vmatprep.subr.mxu0 0.0
        %412 = vmatpush1.xpose.msra.mxu0 %v388
        %413 = vmatprep.subr.mxu0 0.0
        %414 = vmatpush1.xpose.msra.mxu0 %v389
        %415 = vmatprep.subr.mxu0 0.0
        %416 = vmatpush1.xpose.msra.mxu0 %v390
        %417 = vmatprep.subr.mxu0 0.0
        %418 = vmatpush1.xpose.msra.mxu0 %v391
        %419 = vmatprep.subr.mxu0 0.0
        %420 = vmatpush1.xpose.msra.mxu0 %v392
        %421 = vmatprep.subr.mxu0 0.0
        %422 = vmatpush1.xpose.msra.mxu0 %v393
        %423 = vmatprep.subr.mxu0 0.0
        %424 = vmatpush1.xpose.msra.mxu0 %v394
        %425 = vmatprep.subr.mxu0 0.0
        %426 = vmatpush1.xpose.msra.mxu0 %v395
        %427 = vmatprep.subr.mxu0 0.0
        %428 = vmatpush1.xpose.msra.mxu0 %v396
        %429 = vmatprep.subr.mxu0 0.0
        %430 = vmatpush1.xpose.msra.mxu0 %v397
        %431 = vmatprep.subr.mxu0 0.0
        %432 = vmatpush1.xpose.msra.mxu0 0.0
        %433 = vmatprep.subr.mxu0 0.0
        %434 = vmatpush1.xpose.msra.mxu0 0.0
        %435 = vmatprep.subr.mxu0 0.0
        %436 = vmatpush1.xpose.msra.mxu0 0.0
        %437 = vmatprep.subr.mxu0 0.0
        %438 = vmatpush1.xpose.msra.mxu0 0.0
        %439 = vmatprep.subr.mxu0 0.0
        %440 = vmatpush1.xpose.msra.mxu0 0.0
        %441 = vmatprep.subr.mxu0 0.0
        %442 = vmatpush1.xpose.msra.mxu0 0.0
        %443 = vmatprep.subr.mxu0 0.0
        %444 = vmatpush1.xpose.msra.mxu0 0.0
        %445 = vmatprep.subr.mxu0 0.0
        %446 = vmatpush1.xpose.msra.mxu0 0.0
        %447 = vmatprep.subr.mxu0 0.0
        %448 = vmatpush1.xpose.msra.mxu0 0.0
        %449 = vmatprep.subr.mxu0 0.0
        %450 = vmatpush1.xpose.msra.mxu0 0.0
        %451 = vmatprep.subr.mxu0 0.0
        %452 = vmatpush1.xpose.msra.mxu0 0.0
        %453 = vmatprep.subr.mxu0 0.0
        %454 = vmatpush1.xpose.msra.mxu0 0.0
        %455 = vmatprep.subr.mxu0 0.0
        %456 = vmatpush1.xpose.msra.mxu0 0.0
        %457 = vmatprep.subr.mxu0 0.0
        %458 = vmatpush1.xpose.msra.mxu0 0.0
        %459 = vmatprep.subr.mxu0 0.0
        %460 = vmatpush1.xpose.msra.mxu0 0.0
        %461 = vmatprep.subr.mxu0 0.0
        %462 = vmatpush1.xpose.msra.mxu0 0.0
        %463 = vmatprep.mubr.f32.mxu0 0.0
        %464 = vmatmul.mubr.f32.gmra.mrb[0].mxu0 %v398
        %v465 = vpop.f32.mrb[0].mxu0
        %v466 = vadd.f32 0.0, %v465
        %v467 = vpop.f32.mrb[0].mxu0
        %468 = vdwg.mxu0
        %469 = vst [vmem:[%s273] sm:$0xff] %v466
        %v470 = vld [vmem:[#allocation2 + $0x8] sm:$0xff]
        %471 = vmatprep.subr.mxu0 0.0
        %472 = vmatpush1.xpose.msra.mxu0 %v382
        %473 = vmatprep.subr.mxu0 0.0
        %474 = vmatpush1.xpose.msra.mxu0 %v383
        %475 = vmatprep.subr.mxu0 0.0
        %476 = vmatpush1.xpose.msra.mxu0 %v384
        %477 = vmatprep.subr.mxu0 0.0
        %478 = vmatpush1.xpose.msra.mxu0 %v385
        %479 = vmatprep.subr.mxu0 0.0
        %480 = vmatpush1.xpose.msra.mxu0 %v386
        %481 = vmatprep.subr.mxu0 0.0
        %482 = vmatpush1.xpose.msra.mxu0 %v387
        %483 = vmatprep.subr.mxu0 0.0
        %484 = vmatpush1.xpose.msra.mxu0 %v388
        %485 = vmatprep.subr.mxu0 0.0
        %486 = vmatpush1.xpose.msra.mxu0 %v389
        %487 = vmatprep.subr.mxu0 0.0
        %488 = vmatpush1.xpose.msra.mxu0 %v390
        %489 = vmatprep.subr.mxu0 0.0
        %490 = vmatpush1.xpose.msra.mxu0 %v391
        %491 = vmatprep.subr.mxu0 0.0
        %492 = vmatpush1.xpose.msra.mxu0 %v392
        %493 = vmatprep.subr.mxu0 0.0
        %494 = vmatpush1.xpose.msra.mxu0 %v393
        %495 = vmatprep.subr.mxu0 0.0
        %496 = vmatpush1.xpose.msra.mxu0 %v394
        %497 = vmatprep.subr.mxu0 0.0
        %498 = vmatpush1.xpose.msra.mxu0 %v395
        %499 = vmatprep.subr.mxu0 0.0
        %500 = vmatpush1.xpose.msra.mxu0 %v396
        %501 = vmatprep.subr.mxu0 0.0
        %502 = vmatpush1.xpose.msra.mxu0 %v397
        %503 = vmatprep.subr.mxu0 0.0
        %504 = vmatpush1.xpose.msra.mxu0 0.0
        %505 = vmatprep.subr.mxu0 0.0
        %506 = vmatpush1.xpose.msra.mxu0 0.0
        %507 = vmatprep.subr.mxu0 0.0
        %508 = vmatpush1.xpose.msra.mxu0 0.0
        %509 = vmatprep.subr.mxu0 0.0
        %510 = vmatpush1.xpose.msra.mxu0 0.0
        %511 = vmatprep.subr.mxu0 0.0
        %512 = vmatpush1.xpose.msra.mxu0 0.0
        %513 = vmatprep.subr.mxu0 0.0
        %514 = vmatpush1.xpose.msra.mxu0 0.0
        %515 = vmatprep.subr.mxu0 0.0
        %516 = vmatpush1.xpose.msra.mxu0 0.0
        %517 = vmatprep.subr.mxu0 0.0
        %518 = vmatpush1.xpose.msra.mxu0 0.0
        %519 = vmatprep.subr.mxu0 0.0
        %520 = vmatpush1.xpose.msra.mxu0 0.0
        %521 = vmatprep.subr.mxu0 0.0
        %522 = vmatpush1.xpose.msra.mxu0 0.0
        %523 = vmatprep.subr.mxu0 0.0
        %524 = vmatpush1.xpose.msra.mxu0 0.0
        %525 = vmatprep.subr.mxu0 0.0
        %526 = vmatpush1.xpose.msra.mxu0 0.0
        %527 = vmatprep.subr.mxu0 0.0
        %528 = vmatpush1.xpose.msra.mxu0 0.0
        %529 = vmatprep.subr.mxu0 0.0
        %530 = vmatpush1.xpose.msra.mxu0 0.0
        %531 = vmatprep.subr.mxu0 0.0
        %532 = vmatpush1.xpose.msra.mxu0 0.0
        %533 = vmatprep.subr.mxu0 0.0
        %534 = vmatpush1.xpose.msra.mxu0 0.0
        %535 = vmatprep.mubr.f32.mxu0 0.0
        %536 = vmatmul.mubr.f32.gmra.mrb[0].mxu0 %v470
        %v537 = vpop.f32.mrb[0].mxu0
        %v538 = vadd.f32 0.0, %v537
        %v539 = vpop.f32.mrb[0].mxu0
        %540 = vdwg.mxu0
        %s541 = scalar_lea.vmem %s273, 8 [#allocation9]
        %542 = vst [vmem:[%s541] sm:$0xff] %v538
        %s543 = sand.u32 %s134, 1
        %s544 = scalar_lea.sflag [#allocation5], %s543
        %s545 = sand.u32 %s134, 1
        %s546 = smul.addr %s545, 16
        %s547 = scalar_lea.vmem [#allocation9], %s546
        // Predicated region
        $region45: #{tpu_custom_call.1} parent=31 // pred_check
          %p548 = pneg %p144
        $region46: #{tpu_custom_call.1} parent=31 // pred_check_branch
          %550 = sbr.rel (%p548) target = $region48
        $region47: #{tpu_custom_call.1} parent=31 // pred_region
          %s551 = smul.u32 2, %s29
          %s553 = ssub.s32 256, 256
          %554 = vsyncadd %s544, %s553
          %s555 = sadd.s32 %s30, %s551
          %s556 = smul.addr %s28, 2
          %s557 = sadd.s32 %s555, %s556
          %s558 = smul.addr %s557, 128
          %s559 = scalar_lea.hbm %s3, %s558
          %s560 = sshll.u32 %s547, 4
          %s561 = int_to_ptr.vmem [resolvable:$true] %s560
          %566 = dma.vmem_to_hbm [thread:$0]  %s561, 256, %s559, %s544, 128, 128, 8
        $region48: #{tpu_custom_call.1} parent=31 // pred_fallthru
          _
      $region32: #{tpu_custom_call.1} parent=5 // pred_fallthru
        _
      %p567 = scmp.le.s32.totalorder 2, %s18
      // Predicated region
      $region49: #{tpu_custom_call.1} parent=5 // pred_check
        %p568 = pneg %p567
      $region50: #{tpu_custom_call.1} parent=5 // pred_check_branch
        %570 = sbr.rel (%p568) target = $region52
      $region51: #{tpu_custom_call.1} parent=5 // pred_region
        %s571 = ssub.s32 %s18, 2
        // Predicated region
        $region53: #{tpu_custom_call.1} parent=51 // pred_check
          %p572 = pneg %p150
        $region54: #{tpu_custom_call.1} parent=51 // pred_check_branch
          %574 = sbr.rel (%p572) target = $region56
        $region55: #{tpu_custom_call.1} parent=51 // pred_region
          %s575 = sand.u32 %s135, 1
          %s576 = scalar_lea.sflag [#allocation5], %s575
          %s577 = sand.u32 %s135, 1
          %s578 = smul.addr %s577, 16
          %s579 = scalar_lea.vmem [#allocation9], %s578
          %580 = dma.done %s576, 256
        $region56: #{tpu_custom_call.1} parent=51 // pred_fallthru
          _
      $region52: #{tpu_custom_call.1} parent=5 // pred_fallthru
        _
    $region6: #{tpu_custom_call.1} parent=1 // loop_footer
      %s22 = sadd.s32 1, %s18
    $region7: #{tpu_custom_call.1} parent=1 // loop_footer_branch
      %17 = sbr.rel target = $region3
    $region8: #{tpu_custom_call.1} parent=1 // loop_exit
      _
    %581 = vsyncpa [#allocation4], 1
    %s582 = scalar_lea.sflag [#allocation4], 1
    %583 = vsyncpa %s582, 1
    %584 = vsyncpa [#allocation7], 1
    %s585 = scalar_lea.sflag [#allocation7], 1
    %586 = vsyncpa %s585, 1
    %587 = vsyncpa [#allocation5], 1
    %s588 = scalar_lea.sflag [#allocation5], 1
    %589 = vsyncpa %s588, 1

</llo_original>
